<compile_context>
chip_gen: v6e
topology: v6e:2x2x1
jax: 0.10.0
libtpu: 0.0.40
codegen_flags: <defaults>
</compile_context>

<pallas_src>
import functools

import numpy as np

import jax
import jax.numpy as jnp
from jax.experimental import pallas as pl
from jax.experimental.pallas import tpu as pltpu


def _round_up(x, m):
    return (x + m - 1) // m * m


def _conv_kernel(x_ref, w_ref, b_ref, m_ref, o_ref, xs_ref, *,
                 kh_size, kw_size, pad, w_out, hw_real, hw_tile,
                 margin_pad, num_hw_tiles, negative_slope):
    """Grid step = (cout block j, image i, hw tile h).

    x_ref : (1, Cin, HW)             f32 raw flattened image (no pad, no cast)
    w_ref : (KH*KW, Cout_blk, Cin)   f32 per-tap weight matrices
    b_ref : (Cout_blk, 1)            f32 bias
    m_ref : (KW, hw_tile)            f32 horizontal-halo masks for this tile
    o_ref : (1, Cout_blk, hw_tile)   lane-dense output tile
    xs_ref: (Cin, margin_pad + hw_pad + margin_pad) persistent f32 scratch:
            flattened image with zero margins acting as vertical padding.
    """
    i_hw = pl.program_id(2)
    cin = xs_ref.shape[0]

    # Refresh the per-image slab when an image's hw sweep starts.  The hw axis
    # is the innermost grid axis and is marked "arbitrary" (never core-split),
    # so every core's sweep over a (cout-block, image) pair starts at i_hw==0.
    @pl.when(i_hw == 0)
    def _():
        if margin_pad > 0:
            xs_ref[:, :margin_pad] = jnp.zeros((cin, margin_pad), xs_ref.dtype)
        tail = xs_ref.shape[1] - (margin_pad + hw_real)
        if tail > 0:
            xs_ref[:, margin_pad + hw_real:] = jnp.zeros((cin, tail),
                                                         xs_ref.dtype)
        # margin_pad is a multiple of 128 -> lane-aligned interior copy.
        xs_ref[:, margin_pad:margin_pad + hw_real] = x_ref[0].astype(
            xs_ref.dtype)

    # Lane offset of this hw tile inside the flat image (static when 1 tile,
    # so the toy / small-image path uses fully static slice starts).
    if num_hw_tiles == 1:
        q0 = 0
    else:
        q0 = pl.multiple_of(i_hw * hw_tile, 128)

    cout_blk = o_ref.shape[1]
    # Small per-step f32 accumulator (cout_blk x hw_tile); no cross-step
    # reduction, so a local SSA value is enough (compiler keeps it in vregs
    # for small tiles, VMEM for large ones).
    acc = jnp.zeros((cout_blk, hw_tile), jnp.float32)

    # Per-tap shifted matmuls: each tap is a pure lane-offset slice of the
    # flat slab (no reshape, no concat, no im2col temp).
    t = 0
    for kh in range(kh_size):
        for kw in range(kw_size):
            d = (kh - pad) * w_out + (kw - pad)
            xsh = xs_ref[:, pl.ds(q0 + (margin_pad + d), hw_tile)]
            if kw != pad:                      # centre column needs no mask
                xsh = xsh * m_ref[kw:kw + 1, :]
            acc = acc + jnp.dot(w_ref[t], xsh,
                                preferred_element_type=jnp.float32)
            t += 1

    y = acc + b_ref[...]                                  # bias (lane-bcast)
    y = jnp.where(y > 0, y, negative_slope * y)           # LeakyReLU(0.01)
    o_ref[0] = y.astype(o_ref.dtype)


def conv_leaky_relu(x_nchw, weight, bias, *, stride=1, padding=1,
                    negative_slope=0.01):
    """Forward pass of `Conv` (use_bn=False -> BN is the identity).

    x_nchw : (N, Cin, H, W)      float32
    weight : (Cout, Cin, KH, KW) float32
    bias   : (Cout,)             float32
    returns (N, Cout, H, W)      float32
    """
    n, cin, h, w = x_nchw.shape
    cout, cin_w, kh, kw = weight.shape
    assert cin_w == cin
    # TODO(synk): stride > 1 / non-"same" padding would need a wrapper-side
    # space-to-depth pre-layout; tiny-darknet only uses stride-1 same convs.
    assert stride == 1 and kh == kw and 2 * padding == kh - 1, (
        "kernel implements stride-1 'same' convs (e.g. 3x3/pad1, 1x1/pad0)")
    h_out, w_out = h, w
    hw = h_out * w_out

    # --- static tiling decisions -------------------------------------------
    hw_tile = min(1024, _round_up(hw, 128))       # lane-dense spatial tile
    hw_pad = _round_up(hw, hw_tile)
    n_hw = hw_pad // hw_tile
    if cout <= 256:                               # <=256 rows per MXU push
        cout_blk = _round_up(cout, 8)
        cout_pad = cout_blk
    else:
        cout_blk = 256
        cout_pad = _round_up(cout, cout_blk)
    n_cb = cout_pad // cout_blk
    # Vertical halo margin in flat-index space, rounded to a lane multiple so
    # the slab interior copy is lane-aligned.
    margin = padding * w_out + padding
    margin_pad = _round_up(margin, 128) if margin > 0 else 0

    # --- cheap glue (no activation copies) ---------------------------------
    x_flat = x_nchw.reshape(n, cin, hw)           # free metadata reshape
    # Tiny parameter re-layouts only: per-tap (Cout_pad, Cin) matrices + bias.
    w_taps = jnp.transpose(weight, (2, 3, 0, 1)).reshape(kh * kw, cout, cin)
    w_taps = jnp.pad(w_taps,
                     ((0, 0), (0, cout_pad - cout), (0, 0))).astype(jnp.float32)
    b2d = jnp.pad(bias, (0, cout_pad - cout)).reshape(cout_pad,
                                                      1).astype(jnp.float32)
    # Horizontal-halo masks (one row per kw tap): flat output column q is valid
    # for tap kw iff 0 <= (q mod W) + kw - pad < W.  Tiny (KW, hw_pad) table.
    q_cols = np.arange(hw_pad) % w_out
    kw_off = np.arange(kw)[:, None] - padding
    mask_np = ((q_cols[None, :] + kw_off >= 0) &
               (q_cols[None, :] + kw_off < w_out)).astype(np.float32)
    masks = jnp.asarray(mask_np)

    kernel = functools.partial(
        _conv_kernel, kh_size=kh, kw_size=kw, pad=padding, w_out=w_out,
        hw_real=hw, hw_tile=hw_tile, margin_pad=margin_pad,
        num_hw_tiles=n_hw, negative_slope=negative_slope)

    # Rough VMEM budget (double-buffered ins/outs + slab + accumulator) for an
    # explicit limit; capped well below v7x's 64 MiB physical VMEM.
    est = 4 * (2 * (cin * hw + kh * kw * cout_blk * cin + cout_blk
                    + kw * hw_tile + cout_blk * hw_tile)
               + cin * (hw_pad + 2 * margin_pad) + cout_blk * hw_tile)
    vmem_limit = int(min(48 * 1024 * 1024, max(8 * 1024 * 1024, 2 * est)))

    out_flat = pl.pallas_call(
        kernel,
        out_shape=jax.ShapeDtypeStruct((n, cout_pad, hw_pad), x_nchw.dtype),
        grid_spec=pltpu.PrefetchScalarGridSpec(
            num_scalar_prefetch=0,
            # cout-blocks outermost, batch, hw-tiles innermost: weights/bias
            # are VMEM-resident across (batch, hw); the image block is
            # resident across hw tiles and refreshed once per image.
            grid=(n_cb, n, n_hw),
            in_specs=[
                pl.BlockSpec((1, cin, hw), lambda j, i, hh: (i, 0, 0)),
                pl.BlockSpec((kh * kw, cout_blk, cin),
                             lambda j, i, hh: (0, j, 0)),
                pl.BlockSpec((cout_blk, 1), lambda j, i, hh: (j, 0)),
                pl.BlockSpec((kw, hw_tile), lambda j, i, hh: (0, hh)),
            ],
            out_specs=pl.BlockSpec((1, cout_blk, hw_tile),
                                   lambda j, i, hh: (i, j, hh)),
            scratch_shapes=[
                pltpu.VMEM((cin, hw_pad + 2 * margin_pad), jnp.float32)],
        ),
        compiler_params=pltpu.CompilerParams(
            # cout-blocks and batch feed megacore; the hw axis carries the
            # per-image slab scratch, so it stays "arbitrary".
            dimension_semantics=("parallel", "parallel", "arbitrary"),
            vmem_limit_bytes=vmem_limit),
    )(x_flat, w_taps, b2d, masks)

    # Crop the alignment padding (no-op at these sizes) + free trailing split.
    return out_flat[:, :cout, :hw].reshape(n, cout, h_out, w_out)


def _reference(x_nchw, weight, bias, *, stride, padding, negative_slope=0.01):
    """Pure-JAX reference (lax conv) for a correctness check."""
    y = jax.lax.conv_general_dilated(
        x_nchw, weight,
        window_strides=(stride, stride),
        padding=((padding, padding), (padding, padding)),
        dimension_numbers=("NCHW", "OIHW", "NCHW"))
    y = y + bias.reshape(1, -1, 1, 1)
    return jnp.where(y > 0, y, negative_slope * y)


if __name__ == "__main__":
    # Module config: Conv(in_channels=4, out_channels=8, kernel_size=3,
    #                    stride=1, padding=1, use_bn=False)
    N, CIN, H, W = 2, 4, 16, 16
    COUT, K, STRIDE, PAD = 8, 3, 1, 1

    key = jax.random.PRNGKey(0)
    kx, kw_, kb = jax.random.split(key, 3)

    x = jax.random.normal(kx, (N, CIN, H, W), dtype=jnp.float32)
    fan_in = CIN * K * K
    bound = 1.0 / (fan_in ** 0.5)
    weight = jax.random.uniform(kw_, (COUT, CIN, K, K), jnp.float32,
                                -bound, bound)
    bias = jax.random.uniform(kb, (COUT,), jnp.float32, -bound, bound)

    out = conv_leaky_relu(x, weight, bias, stride=STRIDE, padding=PAD)
    out = jax.block_until_ready(out)

    ref = _reference(x, weight, bias, stride=STRIDE, padding=PAD)
    assert out.shape == (N, COUT, H, W), out.shape
    max_err = float(jnp.max(jnp.abs(out - ref)))
    assert jnp.allclose(out, ref, atol=1e-4, rtol=1e-4), max_err

    print("KERNEL_OK")
</pallas_src>

<mosaic_0001>
module attributes {stable_mosaic.version = 11 : i64} {
  func.func @_conv_kernel(%arg0: i32, %arg1: i32, %arg2: i32, %arg3: memref<1x4x256xf32, #tpu.memory_space<vmem>>, %arg4: memref<9x8x4xf32, #tpu.memory_space<vmem>>, %arg5: memref<8x1xf32, #tpu.memory_space<vmem>>, %arg6: memref<3x256xf32, #tpu.memory_space<vmem>>, %arg7: memref<1x8x256xf32, #tpu.memory_space<vmem>>, %arg8: memref<4x512xf32, #tpu.memory_space<vmem>>) attributes {dimension_semantics = [#tpu.dimension_semantics<parallel>, #tpu.dimension_semantics<parallel>, #tpu.dimension_semantics<arbitrary>], iteration_bounds = array<i64: 1, 2, 1>, scalar_prefetch = 0 : i64, scratch_operands = 1 : i64, tpu.core_type = #tpu.core_type<tc>, window_params = [{transform_indices = @transform_0, window_bounds = array<i64: 1, 4, 256>}, {transform_indices = @transform_1, window_bounds = array<i64: 9, 8, 4>}, {transform_indices = @transform_2, window_bounds = array<i64: 8, 1>}, {transform_indices = @transform_3, window_bounds = array<i64: 3, 256>}, {transform_indices = @transform_4, window_bounds = array<i64: 1, 8, 256>}]} {
    %c0_i32 = arith.constant 0 : i32
    %0 = arith.cmpi eq, %arg2, %c0_i32 : i32
    %1 = arith.extui %0 : i1 to i32
    %c0_i32_0 = arith.constant 0 : i32
    %2 = arith.cmpi ne, %1, %c0_i32_0 : i32
    scf.if %2 {
      %cst_56 = arith.constant 0.000000e+00 : f32
      %78 = vector.broadcast %cst_56 : f32 to vector<4x128xf32>
      %c0_57 = arith.constant 0 : index
      %c0_58 = arith.constant 0 : index
      %79 = vector.load %arg8[%c0_57, %c0_58] : memref<4x512xf32, #tpu.memory_space<vmem>>, vector<4x128xf32>
      tpu.vector_store %arg8[%c0_57, %c0_58], %78 {strides = array<i32>} : memref<4x512xf32, #tpu.memory_space<vmem>>, vector<4x128xf32>,
      %cst_59 = arith.constant 0.000000e+00 : f32
      %80 = vector.broadcast %cst_59 : f32 to vector<4x128xf32>
      %c0_60 = arith.constant 0 : index
      %c384 = arith.constant 384 : index
      %81 = vector.load %arg8[%c0_60, %c384] : memref<4x512xf32, #tpu.memory_space<vmem>>, vector<4x128xf32>
      tpu.vector_store %arg8[%c0_60, %c384], %80 {strides = array<i32>} : memref<4x512xf32, #tpu.memory_space<vmem>>, vector<4x128xf32>,
      %c0_61 = arith.constant 0 : index
      %c0_62 = arith.constant 0 : index
      %c0_63 = arith.constant 0 : index
      %82 = vector.load %arg3[%c0_61, %c0_62, %c0_63] : memref<1x4x256xf32, #tpu.memory_space<vmem>>, vector<1x4x256xf32>
      %83 = vector.shape_cast %82 : vector<1x4x256xf32> to vector<4x256xf32>
      %c0_64 = arith.constant 0 : index
      %c128_65 = arith.constant 128 : index
      %84 = vector.load %arg8[%c0_64, %c128_65] : memref<4x512xf32, #tpu.memory_space<vmem>>, vector<4x256xf32>
      tpu.vector_store %arg8[%c0_64, %c128_65], %83 {strides = array<i32>} : memref<4x512xf32, #tpu.memory_space<vmem>>, vector<4x256xf32>,
    } else {
    }
    %cst = arith.constant 0.000000e+00 : f32
    %3 = vector.broadcast %cst : f32 to vector<8x256xf32>
    %c0 = arith.constant 0 : index
    %c111 = arith.constant 111 : index
    %4 = vector.load %arg8[%c0, %c111] : memref<4x512xf32, #tpu.memory_space<vmem>>, vector<4x256xf32>
    %c0_1 = arith.constant 0 : index
    %c0_2 = arith.constant 0 : index
    %5 = vector.load %arg6[%c0_1, %c0_2] : memref<3x256xf32, #tpu.memory_space<vmem>>, vector<1x256xf32>
    %6 = vector.broadcast %5 : vector<1x256xf32> to vector<4x256xf32>
    %7 = arith.mulf %4, %6 : vector<4x256xf32>
    %c0_3 = arith.constant 0 : index
    %c0_4 = arith.constant 0 : index
    %c0_5 = arith.constant 0 : index
    %8 = vector.load %arg4[%c0_3, %c0_4, %c0_5] : memref<9x8x4xf32, #tpu.memory_space<vmem>>, vector<1x8x4xf32>
    %9 = vector.shape_cast %8 : vector<1x8x4xf32> to vector<8x4xf32>
    %cst_6 = arith.constant dense<0.000000e+00> : vector<8x256xf32>
    %10 = tpu.matmul %9, %7, %cst_6 {dimension_numbers = #tpu.dot_dimension_numbers<[1], [0], [0], [1], [0, 0, 1, 1], [], []>} : vector<8x4xf32>, vector<4x256xf32>, vector<8x256xf32> -> vector<8x256xf32>
    %11 = arith.addf %3, %10 : vector<8x256xf32>
    %c0_7 = arith.constant 0 : index
    %c112 = arith.constant 112 : index
    %12 = vector.load %arg8[%c0_7, %c112] : memref<4x512xf32, #tpu.memory_space<vmem>>, vector<4x256xf32>
    %c1 = arith.constant 1 : index
    %c0_8 = arith.constant 0 : index
    %c0_9 = arith.constant 0 : index
    %13 = vector.load %arg4[%c1, %c0_8, %c0_9] : memref<9x8x4xf32, #tpu.memory_space<vmem>>, vector<1x8x4xf32>
    %14 = vector.shape_cast %13 : vector<1x8x4xf32> to vector<8x4xf32>
    %cst_10 = arith.constant dense<0.000000e+00> : vector<8x256xf32>
    %15 = tpu.matmul %14, %12, %cst_10 {dimension_numbers = #tpu.dot_dimension_numbers<[1], [0], [0], [1], [0, 0, 1, 1], [], []>} : vector<8x4xf32>, vector<4x256xf32>, vector<8x256xf32> -> vector<8x256xf32>
    %16 = arith.addf %11, %15 : vector<8x256xf32>
    %c0_11 = arith.constant 0 : index
    %c113 = arith.constant 113 : index
    %17 = vector.load %arg8[%c0_11, %c113] : memref<4x512xf32, #tpu.memory_space<vmem>>, vector<4x256xf32>
    %c2 = arith.constant 2 : index
    %c0_12 = arith.constant 0 : index
    %18 = vector.load %arg6[%c2, %c0_12] : memref<3x256xf32, #tpu.memory_space<vmem>>, vector<1x256xf32>
    %19 = vector.broadcast %18 : vector<1x256xf32> to vector<4x256xf32>
    %20 = arith.mulf %17, %19 : vector<4x256xf32>
    %c2_13 = arith.constant 2 : index
    %c0_14 = arith.constant 0 : index
    %c0_15 = arith.constant 0 : index
    %21 = vector.load %arg4[%c2_13, %c0_14, %c0_15] : memref<9x8x4xf32, #tpu.memory_space<vmem>>, vector<1x8x4xf32>
    %22 = vector.shape_cast %21 : vector<1x8x4xf32> to vector<8x4xf32>
    %cst_16 = arith.constant dense<0.000000e+00> : vector<8x256xf32>
    %23 = tpu.matmul %22, %20, %cst_16 {dimension_numbers = #tpu.dot_dimension_numbers<[1], [0], [0], [1], [0, 0, 1, 1], [], []>} : vector<8x4xf32>, vector<4x256xf32>, vector<8x256xf32> -> vector<8x256xf32>
    %24 = arith.addf %16, %23 : vector<8x256xf32>
    %c0_17 = arith.constant 0 : index
    %c127 = arith.constant 127 : index
    %25 = vector.load %arg8[%c0_17, %c127] : memref<4x512xf32, #tpu.memory_space<vmem>>, vector<4x256xf32>
    %c0_18 = arith.constant 0 : index
    %c0_19 = arith.constant 0 : index
    %26 = vector.load %arg6[%c0_18, %c0_19] : memref<3x256xf32, #tpu.memory_space<vmem>>, vector<1x256xf32>
    %27 = vector.broadcast %26 : vector<1x256xf32> to vector<4x256xf32>
    %28 = arith.mulf %25, %27 : vector<4x256xf32>
    %c3 = arith.constant 3 : index
    %c0_20 = arith.constant 0 : index
    %c0_21 = arith.constant 0 : index
    %29 = vector.load %arg4[%c3, %c0_20, %c0_21] : memref<9x8x4xf32, #tpu.memory_space<vmem>>, vector<1x8x4xf32>
    %30 = vector.shape_cast %29 : vector<1x8x4xf32> to vector<8x4xf32>
    %cst_22 = arith.constant dense<0.000000e+00> : vector<8x256xf32>
    %31 = tpu.matmul %30, %28, %cst_22 {dimension_numbers = #tpu.dot_dimension_numbers<[1], [0], [0], [1], [0, 0, 1, 1], [], []>} : vector<8x4xf32>, vector<4x256xf32>, vector<8x256xf32> -> vector<8x256xf32>
    %32 = arith.addf %24, %31 : vector<8x256xf32>
    %c0_23 = arith.constant 0 : index
    %c128 = arith.constant 128 : index
    %33 = vector.load %arg8[%c0_23, %c128] : memref<4x512xf32, #tpu.memory_space<vmem>>, vector<4x256xf32>
    %c4 = arith.constant 4 : index
    %c0_24 = arith.constant 0 : index
    %c0_25 = arith.constant 0 : index
    %34 = vector.load %arg4[%c4, %c0_24, %c0_25] : memref<9x8x4xf32, #tpu.memory_space<vmem>>, vector<1x8x4xf32>
    %35 = vector.shape_cast %34 : vector<1x8x4xf32> to vector<8x4xf32>
    %cst_26 = arith.constant dense<0.000000e+00> : vector<8x256xf32>
    %36 = tpu.matmul %35, %33, %cst_26 {dimension_numbers = #tpu.dot_dimension_numbers<[1], [0], [0], [1], [0, 0, 1, 1], [], []>} : vector<8x4xf32>, vector<4x256xf32>, vector<8x256xf32> -> vector<8x256xf32>
    %37 = arith.addf %32, %36 : vector<8x256xf32>
    %c0_27 = arith.constant 0 : index
    %c129 = arith.constant 129 : index
    %38 = vector.load %arg8[%c0_27, %c129] : memref<4x512xf32, #tpu.memory_space<vmem>>, vector<4x256xf32>
    %c2_28 = arith.constant 2 : index
    %c0_29 = arith.constant 0 : index
    %39 = vector.load %arg6[%c2_28, %c0_29] : memref<3x256xf32, #tpu.memory_space<vmem>>, vector<1x256xf32>
    %40 = vector.broadcast %39 : vector<1x256xf32> to vector<4x256xf32>
    %41 = arith.mulf %38, %40 : vector<4x256xf32>
    %c5 = arith.constant 5 : index
    %c0_30 = arith.constant 0 : index
    %c0_31 = arith.constant 0 : index
    %42 = vector.load %arg4[%c5, %c0_30, %c0_31] : memref<9x8x4xf32, #tpu.memory_space<vmem>>, vector<1x8x4xf32>
    %43 = vector.shape_cast %42 : vector<1x8x4xf32> to vector<8x4xf32>
    %cst_32 = arith.constant dense<0.000000e+00> : vector<8x256xf32>
    %44 = tpu.matmul %43, %41, %cst_32 {dimension_numbers = #tpu.dot_dimension_numbers<[1], [0], [0], [1], [0, 0, 1, 1], [], []>} : vector<8x4xf32>, vector<4x256xf32>, vector<8x256xf32> -> vector<8x256xf32>
    %45 = arith.addf %37, %44 : vector<8x256xf32>
    %c0_33 = arith.constant 0 : index
    %c143 = arith.constant 143 : index
    %46 = vector.load %arg8[%c0_33, %c143] : memref<4x512xf32, #tpu.memory_space<vmem>>, vector<4x256xf32>
    %c0_34 = arith.constant 0 : index
    %c0_35 = arith.constant 0 : index
    %47 = vector.load %arg6[%c0_34, %c0_35] : memref<3x256xf32, #tpu.memory_space<vmem>>, vector<1x256xf32>
    %48 = vector.broadcast %47 : vector<1x256xf32> to vector<4x256xf32>
    %49 = arith.mulf %46, %48 : vector<4x256xf32>
    %c6 = arith.constant 6 : index
    %c0_36 = arith.constant 0 : index
    %c0_37 = arith.constant 0 : index
    %50 = vector.load %arg4[%c6, %c0_36, %c0_37] : memref<9x8x4xf32, #tpu.memory_space<vmem>>, vector<1x8x4xf32>
    %51 = vector.shape_cast %50 : vector<1x8x4xf32> to vector<8x4xf32>
    %cst_38 = arith.constant dense<0.000000e+00> : vector<8x256xf32>
    %52 = tpu.matmul %51, %49, %cst_38 {dimension_numbers = #tpu.dot_dimension_numbers<[1], [0], [0], [1], [0, 0, 1, 1], [], []>} : vector<8x4xf32>, vector<4x256xf32>, vector<8x256xf32> -> vector<8x256xf32>
    %53 = arith.addf %45, %52 : vector<8x256xf32>
    %c0_39 = arith.constant 0 : index
    %c144 = arith.constant 144 : index
    %54 = vector.load %arg8[%c0_39, %c144] : memref<4x512xf32, #tpu.memory_space<vmem>>, vector<4x256xf32>
    %c7 = arith.constant 7 : index
    %c0_40 = arith.constant 0 : index
    %c0_41 = arith.constant 0 : index
    %55 = vector.load %arg4[%c7, %c0_40, %c0_41] : memref<9x8x4xf32, #tpu.memory_space<vmem>>, vector<1x8x4xf32>
    %56 = vector.shape_cast %55 : vector<1x8x4xf32> to vector<8x4xf32>
    %cst_42 = arith.constant dense<0.000000e+00> : vector<8x256xf32>
    %57 = tpu.matmul %56, %54, %cst_42 {dimension_numbers = #tpu.dot_dimension_numbers<[1], [0], [0], [1], [0, 0, 1, 1], [], []>} : vector<8x4xf32>, vector<4x256xf32>, vector<8x256xf32> -> vector<8x256xf32>
    %58 = arith.addf %53, %57 : vector<8x256xf32>
    %c0_43 = arith.constant 0 : index
    %c145 = arith.constant 145 : index
    %59 = vector.load %arg8[%c0_43, %c145] : memref<4x512xf32, #tpu.memory_space<vmem>>, vector<4x256xf32>
    %c2_44 = arith.constant 2 : index
    %c0_45 = arith.constant 0 : index
    %60 = vector.load %arg6[%c2_44, %c0_45] : memref<3x256xf32, #tpu.memory_space<vmem>>, vector<1x256xf32>
    %61 = vector.broadcast %60 : vector<1x256xf32> to vector<4x256xf32>
    %62 = arith.mulf %59, %61 : vector<4x256xf32>
    %c8 = arith.constant 8 : index
    %c0_46 = arith.constant 0 : index
    %c0_47 = arith.constant 0 : index
    %63 = vector.load %arg4[%c8, %c0_46, %c0_47] : memref<9x8x4xf32, #tpu.memory_space<vmem>>, vector<1x8x4xf32>
    %64 = vector.shape_cast %63 : vector<1x8x4xf32> to vector<8x4xf32>
    %cst_48 = arith.constant dense<0.000000e+00> : vector<8x256xf32>
    %65 = tpu.matmul %64, %62, %cst_48 {dimension_numbers = #tpu.dot_dimension_numbers<[1], [0], [0], [1], [0, 0, 1, 1], [], []>} : vector<8x4xf32>, vector<4x256xf32>, vector<8x256xf32> -> vector<8x256xf32>
    %66 = arith.addf %58, %65 : vector<8x256xf32>
    %c0_49 = arith.constant 0 : index
    %c0_50 = arith.constant 0 : index
    %67 = vector.load %arg5[%c0_49, %c0_50] : memref<8x1xf32, #tpu.memory_space<vmem>>, vector<8x1xf32>
    %68 = vector.broadcast %67 : vector<8x1xf32> to vector<8x256xf32>
    %69 = arith.addf %66, %68 : vector<8x256xf32>
    %cst_51 = arith.constant 0.000000e+00 : f32
    %70 = vector.broadcast %cst_51 : f32 to vector<8x256xf32>
    %71 = arith.cmpf ogt, %69, %70 : vector<8x256xf32>
    %cst_52 = arith.constant 0.00999999977 : f32
    %72 = vector.broadcast %cst_52 : f32 to vector<8x256xf32>
    %73 = arith.mulf %72, %69 : vector<8x256xf32>
    %74 = arith.select %71, %69, %73 : vector<8x256xi1>, vector<8x256xf32>
    %c0_53 = arith.constant 0 : index
    %c0_54 = arith.constant 0 : index
    %c0_55 = arith.constant 0 : index
    %75 = vector.load %arg7[%c0_53, %c0_54, %c0_55] : memref<1x8x256xf32, #tpu.memory_space<vmem>>, vector<1x8x256xf32>
    %76 = vector.shape_cast %75 : vector<1x8x256xf32> to vector<8x256xf32>
    %77 = vector.shape_cast %74 : vector<8x256xf32> to vector<1x8x256xf32>
    tpu.vector_store %arg7[%c0_53, %c0_54, %c0_55], %77 {strides = array<i32>} : memref<1x8x256xf32, #tpu.memory_space<vmem>>, vector<1x8x256xf32>,
    return
  }
  func.func @transform_0(%arg0: i32, %arg1: i32, %arg2: i32) -> (i32, i32, i32) {
    %c0_i32 = arith.constant 0 : i32
    %c0_i32_0 = arith.constant 0 : i32
    %c0_i32_1 = arith.constant 0 : i32
    return %arg1, %c0_i32, %c0_i32_0 : i32, i32, i32
  }
  func.func @transform_1(%arg0: i32, %arg1: i32, %arg2: i32) -> (i32, i32, i32) {
    %c0_i32 = arith.constant 0 : i32
    %c0_i32_0 = arith.constant 0 : i32
    %c0_i32_1 = arith.constant 0 : i32
    return %c0_i32, %arg0, %c0_i32_0 : i32, i32, i32
  }
  func.func @transform_2(%arg0: i32, %arg1: i32, %arg2: i32) -> (i32, i32) {
    %c0_i32 = arith.constant 0 : i32
    %c0_i32_0 = arith.constant 0 : i32
    return %arg0, %c0_i32 : i32, i32
  }
  func.func @transform_3(%arg0: i32, %arg1: i32, %arg2: i32) -> (i32, i32) {
    %c0_i32 = arith.constant 0 : i32
    %c0_i32_0 = arith.constant 0 : i32
    return %c0_i32, %arg2 : i32, i32
  }
  func.func @transform_4(%arg0: i32, %arg1: i32, %arg2: i32) -> (i32, i32, i32) {
    %c0_i32 = arith.constant 0 : i32
    return %arg1, %arg0, %arg2 : i32, i32, i32
  }
}

</mosaic_0001>

<llo_original>
// kernel: tpu_custom_call.1
$region0: #{tpu_custom_call.1}
  #allocation0 [shape = 'u32[]', space=smem, size = 0x4, offset = 0x4, fixed_abs, tag = 'smem constant byte address 0x4 - core index']
  #allocation1 [shape = 'u32[144,128]{1,0:T(1,128)}', space=vmem, size = 0x12000, scoped, tag = 'internal scratch']
  #allocation2 [shape = 'f32[4,512]{1,0:T(4,128)}', space=vmem, size = 0x2000, scoped, tag = 'scratch operand']
  %s0 = inlined_call_operand.vmem [shape: f32[2,4,256], index: 0, kind: input, shape index: {}]
  %s1 = inlined_call_operand.vmem [shape: f32[9,8,4], index: 1, kind: input, shape index: {}]
  %s2 = inlined_call_operand.vmem [shape: f32[8,1], index: 2, kind: input, shape index: {}]
  %s3 = inlined_call_operand.vmem [shape: f32[3,256], index: 3, kind: input, shape index: {}]
  %s4 = inlined_call_operand.hbm [shape: f32[2,8,256], index: 4, kind: output, shape index: {}]
  %s5 = sld [smem:[#allocation0]]
  $region53: #{tpu_custom_call.1} parent=0
    _
  %s7 = ssub.s32 1, %s5
  %s8 = scalar_select 0, %s7, %s5
  $region1: #{tpu_custom_call.1} parent=0
    #allocation3 [shape = 'u8[16384]{0}', space=vmem, size = 0x4000, scoped, tag = 'output window, operand 0']
    #allocation4 [shape = 's32[2]{0}', space=sflag, size = 0x8, scoped, tag = 'scoped memory for tpu_custom_call.1']
    %9 = vsyncpa [#allocation4], 0
    %s10 = scalar_lea.sflag [#allocation4], 1
    %11 = vsyncpa %s10, 0
    loop: start=0, step=1, limit=4
    $region2: #{tpu_custom_call.1} parent=1 // loop_pre_header
      _
    $region3: #{tpu_custom_call.1} parent=1 // loop_header
      %s13 = sphi 0, %s17
      %p14 = scmp.ge.s32.totalorder %s13, 4
      %s20 = sphi 0, %s39
      %s21 = sphi 0, %s35
      %s22 = sphi 0, %s31
      %s23 = sphi 0, %s20
      %s24 = sphi 0, %s21
      %s25 = sphi 0, %s22
      %s26 = sphi 0, %s23
      %s27 = sphi 0, %s24
      %s28 = sphi 0, %s25
      %s42 = sphi 0, %s44
      %s45 = sphi 0, %s42
      %s46 = sphi 0, %s45
      %s62 = sphi 0, %s46
      %s68 = sphi 0, %s70
      %s71 = sphi 0, %s68
      %s72 = sphi 0, %s71
      %s88 = sphi 0, %s72
      %s94 = sphi 0, %s96
      %s97 = sphi 0, %s94
      %s98 = sphi 0, %s97
      %s114 = sphi 0, %s98
      %s120 = sphi 0, %s122
      %s123 = sphi 0, %s120
      %s124 = sphi 0, %s123
      %s140 = sphi 0, %s124
      %s150 = sphi 0, %s152
      %s153 = sphi 0, %s150
      %s154 = sphi 0, %s153
      %s170 = sphi 0, %s154
    $region4: #{tpu_custom_call.1} parent=1 // loop_header_branch
      %16 = sbr.rel (%p14) target = $region8
    $region5: #{tpu_custom_call.1} parent=1 // loop_body
      %s18 = ssub.s32 %s13, 1
      %s19 = ssub.s32 %s13, 2
      %s29 = sadd.s32 1, %s22
      %p30 = scmp.ge.s32.totalorder %s29, 1
      %s31 = scalar_select %p30, 0, %s29
      %s32 = sadd.s32 1, %s21
      %s33 = scalar_select %p30, %s32, %s21
      %p34 = scmp.ge.s32.totalorder %s33, 2
      %s35 = scalar_select %p34, 0, %s33
      %s36 = sadd.s32 1, %s20
      %s37 = scalar_select %p34, %s36, %s20
      %p38 = scmp.ge.s32.totalorder %s37, 1
      %s39 = scalar_select %p38, 0, %s37
      %s40 = ssub.s32 %s21, %s35
      %p41 = scmp.eq.s32.totalorder %s40, 0
      %s43 = sadd.s32 %s42, 1
      %s44 = scalar_select %p41, %s42, %s43
      %p47 = pneg %p41
      %p48 = scmp.eq.s32.totalorder %s13, 1
      %p49 = por %p47, %p48
      %p50 = scmp.ne.s32.totalorder %s42, %s45
      %p51 = scmp.eq.s32.totalorder %s13, 0
      %p52 = por %p50, %p51
      %p53 = scmp.ne.s32.totalorder %s42, %s45
      %p54 = scmp.eq.s32.totalorder %s18, 1
      %p55 = por %p53, %p54
      %p56 = scmp.ne.s32.totalorder %s45, %s46
      %p57 = scmp.eq.s32.totalorder %s18, 0
      %p58 = por %p56, %p57
      %p59 = scmp.ne.s32.totalorder %s45, %s46
      %p60 = scmp.eq.s32.totalorder %s19, 1
      %p61 = por %p59, %p60
      %p63 = scmp.ne.s32.totalorder %s46, %s62
      %p64 = scmp.eq.s32.totalorder %s19, 0
      %p65 = por %p63, %p64
      %s66 = ssub.s32 %s20, %s39
      %p67 = scmp.eq.s32.totalorder %s66, 0
      %s69 = sadd.s32 %s68, 1
      %s70 = scalar_select %p67, %s68, %s69
      %p73 = pneg %p67
      %p74 = scmp.eq.s32.totalorder %s13, 1
      %p75 = por %p73, %p74
      %p76 = scmp.ne.s32.totalorder %s68, %s71
      %p77 = scmp.eq.s32.totalorder %s13, 0
      %p78 = por %p76, %p77
      %p79 = scmp.ne.s32.totalorder %s68, %s71
      %p80 = scmp.eq.s32.totalorder %s18, 1
      %p81 = por %p79, %p80
      %p82 = scmp.ne.s32.totalorder %s71, %s72
      %p83 = scmp.eq.s32.totalorder %s18, 0
      %p84 = por %p82, %p83
      %p85 = scmp.ne.s32.totalorder %s71, %s72
      %p86 = scmp.eq.s32.totalorder %s19, 1
      %p87 = por %p85, %p86
      %p89 = scmp.ne.s32.totalorder %s72, %s88
      %p90 = scmp.eq.s32.totalorder %s19, 0
      %p91 = por %p89, %p90
      %s92 = ssub.s32 %s20, %s39
      %p93 = scmp.eq.s32.totalorder %s92, 0
      %s95 = sadd.s32 %s94, 1
      %s96 = scalar_select %p93, %s94, %s95
      %p99 = pneg %p93
      %p100 = scmp.eq.s32.totalorder %s13, 1
      %p101 = por %p99, %p100
      %p102 = scmp.ne.s32.totalorder %s94, %s97
      %p103 = scmp.eq.s32.totalorder %s13, 0
      %p104 = por %p102, %p103
      %p105 = scmp.ne.s32.totalorder %s94, %s97
      %p106 = scmp.eq.s32.totalorder %s18, 1
      %p107 = por %p105, %p106
      %p108 = scmp.ne.s32.totalorder %s97, %s98
      %p109 = scmp.eq.s32.totalorder %s18, 0
      %p110 = por %p108, %p109
      %p111 = scmp.ne.s32.totalorder %s97, %s98
      %p112 = scmp.eq.s32.totalorder %s19, 1
      %p113 = por %p111, %p112
      %p115 = scmp.ne.s32.totalorder %s98, %s114
      %p116 = scmp.eq.s32.totalorder %s19, 0
      %p117 = por %p115, %p116
      %s118 = ssub.s32 %s22, %s31
      %p119 = scmp.eq.s32.totalorder %s118, 0
      %s121 = sadd.s32 %s120, 1
      %s122 = scalar_select %p119, %s120, %s121
      %p125 = pneg %p119
      %p126 = scmp.eq.s32.totalorder %s13, 1
      %p127 = por %p125, %p126
      %p128 = scmp.ne.s32.totalorder %s120, %s123
      %p129 = scmp.eq.s32.totalorder %s13, 0
      %p130 = por %p128, %p129
      %p131 = scmp.ne.s32.totalorder %s120, %s123
      %p132 = scmp.eq.s32.totalorder %s18, 1
      %p133 = por %p131, %p132
      %p134 = scmp.ne.s32.totalorder %s123, %s124
      %p135 = scmp.eq.s32.totalorder %s18, 0
      %p136 = por %p134, %p135
      %p137 = scmp.ne.s32.totalorder %s123, %s124
      %p138 = scmp.eq.s32.totalorder %s19, 1
      %p139 = por %p137, %p138
      %p141 = scmp.ne.s32.totalorder %s124, %s140
      %p142 = scmp.eq.s32.totalorder %s19, 0
      %p143 = por %p141, %p142
      %s144 = ssub.s32 %s21, %s35
      %s145 = ssub.s32 %s20, %s39
      %s146 = sor.u32 %s144, %s145
      %s147 = ssub.s32 %s22, %s31
      %s148 = sor.u32 %s146, %s147
      %p149 = scmp.eq.s32.totalorder %s148, 0
      %s151 = sadd.s32 %s150, 1
      %s152 = scalar_select %p149, %s150, %s151
      %p155 = pneg %p149
      %p156 = scmp.eq.s32.totalorder %s13, 1
      %p157 = por %p155, %p156
      %p158 = scmp.ne.s32.totalorder %s150, %s153
      %p159 = scmp.eq.s32.totalorder %s13, 0
      %p160 = por %p158, %p159
      %p161 = scmp.ne.s32.totalorder %s150, %s153
      %p162 = scmp.eq.s32.totalorder %s18, 1
      %p163 = por %p161, %p162
      %p164 = scmp.ne.s32.totalorder %s153, %s154
      %p165 = scmp.eq.s32.totalorder %s18, 0
      %p166 = por %p164, %p165
      %p167 = scmp.ne.s32.totalorder %s153, %s154
      %p168 = scmp.eq.s32.totalorder %s19, 1
      %p169 = por %p167, %p168
      %p171 = scmp.ne.s32.totalorder %s154, %s170
      %p172 = scmp.eq.s32.totalorder %s19, 0
      %p173 = por %p171, %p172
      %p174 = scmp.le.s32.totalorder 1, %s13
      %p175 = scmp.lt.s32.totalorder %s13, 3
      %p176 = pnand %p174, %p175
      %p177 = pneg %p176
      // Predicated region
      $region9: #{tpu_custom_call.1} parent=5 // pred_check
        _
      $region10: #{tpu_custom_call.1} parent=5 // pred_check_branch
        %179 = sbr.rel (%p176) target = $region12
      $region11: #{tpu_custom_call.1} parent=5 // pred_region
        %s180 = ssub.s32 %s13, 1
        // Predicated region
        $region13: #{tpu_custom_call.1} parent=11 // pred_check
          %p181 = pneg %p84
        $region14: #{tpu_custom_call.1} parent=11 // pred_check_branch
          %183 = sbr.rel (%p181) target = $region16
        $region15: #{tpu_custom_call.1} parent=11 // pred_region
          %p184 = scmp.lt.s32.totalorder %s23, 0
          %s185 = scalar_select %p184, %s23, 0
          %s186 = smul.addr %s185, 8
          %s187 = scalar_lea.vmem %s1, %s186
        $region16: #{tpu_custom_call.1} parent=11 // pred_fallthru
          _
        // Predicated region
        $region17: #{tpu_custom_call.1} parent=11 // pred_check
          %p188 = pneg %p110
        $region18: #{tpu_custom_call.1} parent=11 // pred_check_branch
          %190 = sbr.rel (%p188) target = $region20
        $region19: #{tpu_custom_call.1} parent=11 // pred_region
          %p191 = scmp.lt.s32.totalorder %s23, 0
          %s192 = scalar_select %p191, %s23, 0
          %s193 = smul.addr %s192, 8
          %s194 = scalar_lea.vmem %s2, %s193
        $region20: #{tpu_custom_call.1} parent=11 // pred_fallthru
          _
        // Predicated region
        $region21: #{tpu_custom_call.1} parent=11 // pred_check
          %p195 = pneg %p136
        $region22: #{tpu_custom_call.1} parent=11 // pred_check_branch
          %197 = sbr.rel (%p195) target = $region24
        $region23: #{tpu_custom_call.1} parent=11 // pred_region
          %s198 = smul.u32 2, %s25
          %p199 = scmp.lt.s32.totalorder %s198, 1
          %s200 = scalar_select %p199, %s198, 1
          %s201 = smul.addr %s200, 4
          %s202 = scalar_lea.vmem %s3, %s201
          %s203 = smul.u32 2, %s25
        $region24: #{tpu_custom_call.1} parent=11 // pred_fallthru
          _
      $region12: #{tpu_custom_call.1} parent=5 // pred_fallthru
        _
      %p204 = scmp.lt.s32.totalorder %s13, 2
      // Predicated region
      $region25: #{tpu_custom_call.1} parent=5 // pred_check
        %p205 = pneg %p204
      $region26: #{tpu_custom_call.1} parent=5 // pred_check_branch
        %207 = sbr.rel (%p205) target = $region28
      $region27: #{tpu_custom_call.1} parent=5 // pred_region
        // Predicated region
        $region29: #{tpu_custom_call.1} parent=27 // pred_check
          %p208 = pneg %p52
        $region30: #{tpu_custom_call.1} parent=27 // pred_check_branch
          %210 = sbr.rel (%p208) target = $region32
        $region31: #{tpu_custom_call.1} parent=27 // pred_region
          %p211 = scmp.lt.s32.totalorder %s21, 1
          %s212 = scalar_select %p211, %s21, 1
          %s213 = smul.addr %s212, 2
          %s214 = smul.addr %s213, 4
          %s215 = scalar_lea.vmem %s0, %s214
        $region32: #{tpu_custom_call.1} parent=27 // pred_fallthru
          _
      $region28: #{tpu_custom_call.1} parent=5 // pred_fallthru
        _
      %p216 = scmp.le.s32.totalorder 1, %s13
      %p217 = scmp.lt.s32.totalorder %s13, 3
      %p218 = pnand %p216, %p217
      %p219 = pneg %p218
      // Predicated region
      $region33: #{tpu_custom_call.1} parent=5 // pred_check
        _
      $region34: #{tpu_custom_call.1} parent=5 // pred_check_branch
        %221 = sbr.rel (%p218) target = $region36
      $region35: #{tpu_custom_call.1} parent=5 // pred_region
        %s222 = ssub.s32 %s13, 1
        %p223 = scmp.lt.s32.totalorder %s24, 1
        %s224 = scalar_select %p223, %s24, 1
        %s225 = smul.addr %s224, 2
        %s226 = smul.addr %s225, 4
        %s227 = scalar_lea.vmem %s0, %s226
        %p228 = pneg %p58
        %p229 = pneg %p55
        %p230 = scmp.lt.s32.totalorder %s23, 0
        %s231 = scalar_select %p230, %s23, 0
        %s232 = smul.addr %s231, 8
        %s233 = scalar_lea.vmem %s1, %s232
        %p234 = pneg %p84
        %p235 = pneg %p81
        %p236 = scmp.lt.s32.totalorder %s23, 0
        %s237 = scalar_select %p236, %s23, 0
        %s238 = smul.addr %s237, 8
        %s239 = scalar_lea.vmem %s2, %s238
        %p240 = pneg %p110
        %p241 = pneg %p107
        %s242 = smul.u32 2, %s25
        %p243 = scmp.lt.s32.totalorder %s242, 1
        %s244 = scalar_select %p243, %s242, 1
        %s245 = smul.addr %s244, 4
        %s246 = scalar_lea.vmem %s3, %s245
        %p247 = pneg %p136
        %p248 = pneg %p133
        %p249 = pneg %p166
        %p250 = pneg %p163
        %s251 = sand.u32 %s153, 1
        %s252 = scalar_lea.sflag [#allocation4], %s251
        %s253 = sand.u32 %s153, 1
        %s254 = smul.addr %s253, 16
        %s255 = scalar_lea.vmem [#allocation3], %s254
        %p256 = scmp.lt.s32.totalorder %s24, 1
        %s257 = scalar_select %p256, %s24, 1
        %s258 = smul.addr %s257, 2
        %s259 = smul.addr %s258, 4
        %s260 = scalar_lea.vmem %s0, %s259
        %p261 = scmp.lt.s32.totalorder %s23, 0
        %s262 = scalar_select %p261, %s23, 0
        %s263 = smul.addr %s262, 8
        %s264 = scalar_lea.vmem %s1, %s263
        %p265 = scmp.lt.s32.totalorder %s23, 0
        %s266 = scalar_select %p265, %s23, 0
        %s267 = smul.addr %s266, 8
        %s268 = scalar_lea.vmem %s2, %s267
        %s269 = smul.u32 2, %s25
        %p270 = scmp.lt.s32.totalorder %s269, 1
        %s271 = scalar_select %p270, %s269, 1
        %s272 = smul.addr %s271, 4
        %s273 = scalar_lea.vmem %s3, %s272
        %s274 = smul.u32 2, %s25
        %s275 = smul.u32 2, %s25
        %p276 = scmp.eq.s32.totalorder %s25, 0
        // Predicated region
        $region37: #{tpu_custom_call.1} parent=35 // pred_check
          %p277 = pneg %p276
        $region38: #{tpu_custom_call.1} parent=35 // pred_check_branch
          %279 = sbr.rel (%p277) target = $region40
        $region39: #{tpu_custom_call.1} parent=35 // pred_region
          %280 = vst [vmem:[#allocation2] sm:$0xf] 0.0
          %281 = vst [vmem:[#allocation2 + $0xc] sm:$0xf] 0.0
          %v282 = vld [vmem:[%s260] sm:$0xff]
          %283 = vst [vmem:[#allocation2 + $0x4] sm:$0xff] %v282
        $region40: #{tpu_custom_call.1} parent=35 // pred_fallthru
          _
        %v284 = vld [vmem:[#allocation2] sm:$0xff]
        %v285 = vld [vmem:[#allocation2 + $0x8] sm:$0xf]
        %v286 = vld [vmem:[%s273] ss:$4 sm:$0x3]
        %v288 = vlaneseq
        %v289 = vshrl.u32 %v288, 7
        %v290 = vsub.s32 0, %v289
        %v291 = vrot.slane %v286, %v290
        %v292 = vlaneseq
        %v293 = vshrl.u32 %v292, 7
        %v294 = vsub.s32 1, %v293
        %v295 = vrot.slane %v286, %v294
        %v296 = vcombine.low %v291, %v295
        %297 = vrot.lane.b32.xlu0 %v296, 111
        %v298 = vpop.permute.xlu0 %297
        %v299 = vrot.slane %v298, 4
        %vm300 = vcmask 908288
        %v301 = vsel %vm300, %v299, %v298
        %v304 = vmul.f32 %v284, %v301
        %v305 = vmul.f32 %v285, %v299
        %v306 = vld [vmem:[%s264] sm:$0xff]
        %s307 = scalar_lea.vmem %s264, 8
        %v308 = vld [vmem:[%s307] sm:$0xff]
        %v311 = vcombine.high %v284, %v284
        %312 = vrot.lane.b32.xlu0 %v284, 16
        %v313 = vpop.permute.xlu0 %312
        %314 = vrot.lane.b32.xlu0 %v311, 16
        %v315 = vpop.permute.xlu0 %314
        %316 = vrot.lane.b32.xlu0 %v285, 16
        %v317 = vpop.permute.xlu0 %316
        %vm318 = vcmask 130048
        %v319 = vsel %vm318, %v313, %v315
        %v320 = vsel %vm318, %v315, %v317
        %vm321 = vcmask 31744
        %v323 = vsel %vm321, %v308, 0
        %vm325 = vcmask 1043456
        %v326 = vsel %vm325, %v319, 0
        %v328 = vsel %vm325, %v320, 0
        %330 = vmatprep.subr.mxu0 0.0
        %331 = vmatpush1.msra.mxu0 0.0
        %332 = vmatprep.subr.mxu0 0.0
        %333 = vmatpush1.msra.mxu0 0.0
        %334 = vmatprep.subr.mxu0 0.0
        %335 = vmatpush1.msra.mxu0 0.0
        %336 = vmatprep.subr.mxu0 0.0
        %337 = vmatpush1.msra.mxu0 0.0
        %338 = vmatprep.subr.mxu0 0.0
        %339 = vmatpush1.msra.mxu0 0.0
        %340 = vmatprep.subr.mxu0 0.0
        %341 = vmatpush1.msra.mxu0 0.0
        %342 = vmatprep.subr.mxu0 0.0
        %343 = vmatpush1.msra.mxu0 0.0
        %344 = vmatprep.subr.mxu0 0.0
        %345 = vmatpush1.msra.mxu0 0.0
        %346 = vmatprep.subr.mxu0 0.0
        %347 = vmatpush1.msra.mxu0 0.0
        %348 = vmatprep.subr.mxu0 0.0
        %349 = vmatpush1.msra.mxu0 0.0
        %350 = vmatprep.subr.mxu0 0.0
        %351 = vmatpush1.msra.mxu0 0.0
        %352 = vmatprep.subr.mxu0 0.0
        %353 = vmatpush1.msra.mxu0 0.0
        %354 = vmatprep.subr.mxu0 0.0
        %355 = vmatpush1.msra.mxu0 0.0
        %356 = vmatprep.subr.mxu0 0.0
        %357 = vmatpush1.msra.mxu0 0.0
        %358 = vmatprep.subr.mxu0 0.0
        %359 = vmatpush1.msra.mxu0 0.0
        %360 = vmatprep.subr.mxu0 %v328
        %361 = vmatpush1.msra.mxu0 %v326
        %362 = vmatprep.subr.mxu0 0.0
        %363 = vmatpush2.msra.mxu0 0.0
        %364 = vmatprep.subr.mxu0 0.0
        %365 = vmatpush2.msra.mxu0 0.0
        %366 = vmatprep.subr.mxu0 0.0
        %367 = vmatpush2.msra.mxu0 0.0
        %368 = vmatprep.subr.mxu0 0.0
        %369 = vmatpush2.msra.mxu0 0.0
        %370 = vmatprep.subr.mxu0 0.0
        %371 = vmatpush2.msra.mxu0 0.0
        %372 = vmatprep.subr.mxu0 0.0
        %373 = vmatpush2.msra.mxu0 0.0
        %374 = vmatprep.subr.mxu0 0.0
        %375 = vmatpush2.msra.mxu0 0.0
        %376 = vmatprep.subr.mxu0 0.0
        %377 = vmatpush2.msra.mxu0 0.0
        %378 = vmatprep.subr.mxu0 0.0
        %379 = vmatpush2.msra.mxu0 0.0
        %380 = vmatprep.subr.mxu0 0.0
        %381 = vmatpush2.msra.mxu0 0.0
        %382 = vmatprep.subr.mxu0 0.0
        %383 = vmatpush2.msra.mxu0 0.0
        %384 = vmatprep.subr.mxu0 0.0
        %385 = vmatpush2.msra.mxu0 0.0
        %386 = vmatprep.subr.mxu0 0.0
        %387 = vmatpush2.msra.mxu0 0.0
        %388 = vmatprep.subr.mxu0 0.0
        %389 = vmatpush2.msra.mxu0 0.0
        %390 = vmatprep.subr.mxu0 0.0
        %391 = vmatpush2.msra.mxu0 0.0
        %392 = vmatprep.subr.mxu0 0.0
        %393 = vmatpush2.msra.mxu0 0.0
        %394 = vmatprep.mubr.f32.mxu0 0.0
        %395 = vmatmul.mubr.f32.gmra.mxu0 %v323
        %v396 = vpop.f32.mrf.mxu0
        %v397 = vadd.f32 0.0, %v396
        %v398 = vpop.f32.mrf.mxu0
        %v399 = vadd.f32 0.0, %v398
        %400 = vdwg.mxu0
        %v403 = vcombine.high %v304, %v304
        %404 = vrot.lane.b32.xlu0 %v304, 17
        %v405 = vpop.permute.xlu0 %404
        %406 = vrot.lane.b32.xlu0 %v403, 17
        %v407 = vpop.permute.xlu0 %406
        %408 = vrot.lane.b32.xlu0 %v305, 17
        %v409 = vpop.permute.xlu0 %408
        %vm410 = vcmask 138240
        %v411 = vsel %vm410, %v405, %v407
        %v412 = vsel %vm410, %v407, %v409
        %v414 = vsel %vm321, %v306, 0
        %v416 = vsel %vm325, %v411, 0
        %v418 = vsel %vm325, %v412, 0
        %420 = vmatprep.subr.mxu0 0.0
        %421 = vmatpush1.msra.mxu0 0.0
        %422 = vmatprep.subr.mxu0 0.0
        %423 = vmatpush1.msra.mxu0 0.0
        %424 = vmatprep.subr.mxu0 0.0
        %425 = vmatpush1.msra.mxu0 0.0
        %426 = vmatprep.subr.mxu0 0.0
        %427 = vmatpush1.msra.mxu0 0.0
        %428 = vmatprep.subr.mxu0 0.0
        %429 = vmatpush1.msra.mxu0 0.0
        %430 = vmatprep.subr.mxu0 0.0
        %431 = vmatpush1.msra.mxu0 0.0
        %432 = vmatprep.subr.mxu0 0.0
        %433 = vmatpush1.msra.mxu0 0.0
        %434 = vmatprep.subr.mxu0 0.0
        %435 = vmatpush1.msra.mxu0 0.0
        %436 = vmatprep.subr.mxu0 0.0
        %437 = vmatpush1.msra.mxu0 0.0
        %438 = vmatprep.subr.mxu0 0.0
        %439 = vmatpush1.msra.mxu0 0.0
        %440 = vmatprep.subr.mxu0 0.0
        %441 = vmatpush1.msra.mxu0 0.0
        %442 = vmatprep.subr.mxu0 0.0
        %443 = vmatpush1.msra.mxu0 0.0
        %444 = vmatprep.subr.mxu0 0.0
        %445 = vmatpush1.msra.mxu0 0.0
        %446 = vmatprep.subr.mxu0 0.0
        %447 = vmatpush1.msra.mxu0 0.0
        %448 = vmatprep.subr.mxu0 0.0
        %449 = vmatpush1.msra.mxu0 0.0
        %450 = vmatprep.subr.mxu0 %v418
        %451 = vmatpush1.msra.mxu0 %v416
        %452 = vmatprep.subr.mxu0 0.0
        %453 = vmatpush2.msra.mxu0 0.0
        %454 = vmatprep.subr.mxu0 0.0
        %455 = vmatpush2.msra.mxu0 0.0
        %456 = vmatprep.subr.mxu0 0.0
        %457 = vmatpush2.msra.mxu0 0.0
        %458 = vmatprep.subr.mxu0 0.0
        %459 = vmatpush2.msra.mxu0 0.0
        %460 = vmatprep.subr.mxu0 0.0
        %461 = vmatpush2.msra.mxu0 0.0
        %462 = vmatprep.subr.mxu0 0.0
        %463 = vmatpush2.msra.mxu0 0.0
        %464 = vmatprep.subr.mxu0 0.0
        %465 = vmatpush2.msra.mxu0 0.0
        %466 = vmatprep.subr.mxu0 0.0
        %467 = vmatpush2.msra.mxu0 0.0
        %468 = vmatprep.subr.mxu0 0.0
        %469 = vmatpush2.msra.mxu0 0.0
        %470 = vmatprep.subr.mxu0 0.0
        %471 = vmatpush2.msra.mxu0 0.0
        %472 = vmatprep.subr.mxu0 0.0
        %473 = vmatpush2.msra.mxu0 0.0
        %474 = vmatprep.subr.mxu0 0.0
        %475 = vmatpush2.msra.mxu0 0.0
        %476 = vmatprep.subr.mxu0 0.0
        %477 = vmatpush2.msra.mxu0 0.0
        %478 = vmatprep.subr.mxu0 0.0
        %479 = vmatpush2.msra.mxu0 0.0
        %480 = vmatprep.subr.mxu0 0.0
        %481 = vmatpush2.msra.mxu0 0.0
        %482 = vmatprep.subr.mxu0 0.0
        %483 = vmatpush2.msra.mxu0 0.0
        %484 = vmatprep.mubr.f32.mxu0 0.0
        %485 = vmatmul.mubr.f32.gmra.mxu0 %v414
        %v486 = vpop.f32.mrf.mxu0
        %v487 = vadd.f32 %v397, %v486
        %v488 = vpop.f32.mrf.mxu0
        %v489 = vadd.f32 %v399, %v488
        %490 = vdwg.mxu0
        %v491 = vld [vmem:[#allocation2] sm:$0xff]
        %v492 = vld [vmem:[#allocation2 + $0x8] sm:$0xf]
        %s493 = scalar_lea.vmem %s273, 2
        %v494 = vld [vmem:[%s493] ss:$4 sm:$0x3]
        %v496 = vlaneseq
        %v497 = vshrl.u32 %v496, 7
        %v498 = vsub.s32 0, %v497
        %v499 = vrot.slane %v494, %v498
        %v500 = vlaneseq
        %v501 = vshrl.u32 %v500, 7
        %v502 = vsub.s32 1, %v501
        %v503 = vrot.slane %v494, %v502
        %v504 = vcombine.low %v499, %v503
        %505 = vrot.lane.b32.xlu0 %v504, 113
        %v506 = vpop.permute.xlu0 %505
        %v507 = vrot.slane %v506, 4
        %vm508 = vcmask 924672
        %v509 = vsel %vm508, %v507, %v506
        %v512 = vmul.f32 %v491, %v509
        %v513 = vmul.f32 %v492, %v507
        %s514 = scalar_lea.vmem %s264, 16
        %v515 = vld [vmem:[%s514] sm:$0xff]
        %v518 = vcombine.high %v512, %v512
        %519 = vrot.lane.b32.xlu0 %v512, 15
        %v520 = vpop.permute.xlu0 %519
        %521 = vrot.lane.b32.xlu0 %v518, 15
        %v522 = vpop.permute.xlu0 %521
        %523 = vrot.lane.b32.xlu0 %v513, 15
        %v524 = vpop.permute.xlu0 %523
        %vm525 = vcmask 121856
        %v526 = vsel %vm525, %v520, %v522
        %v527 = vsel %vm525, %v522, %v524
        %v529 = vsel %vm321, %v515, 0
        %v531 = vsel %vm325, %v526, 0
        %v533 = vsel %vm325, %v527, 0
        %535 = vmatprep.subr.mxu0 0.0
        %536 = vmatpush1.msra.mxu0 0.0
        %537 = vmatprep.subr.mxu0 0.0
        %538 = vmatpush1.msra.mxu0 0.0
        %539 = vmatprep.subr.mxu0 0.0
        %540 = vmatpush1.msra.mxu0 0.0
        %541 = vmatprep.subr.mxu0 0.0
        %542 = vmatpush1.msra.mxu0 0.0
        %543 = vmatprep.subr.mxu0 0.0
        %544 = vmatpush1.msra.mxu0 0.0
        %545 = vmatprep.subr.mxu0 0.0
        %546 = vmatpush1.msra.mxu0 0.0
        %547 = vmatprep.subr.mxu0 0.0
        %548 = vmatpush1.msra.mxu0 0.0
        %549 = vmatprep.subr.mxu0 0.0
        %550 = vmatpush1.msra.mxu0 0.0
        %551 = vmatprep.subr.mxu0 0.0
        %552 = vmatpush1.msra.mxu0 0.0
        %553 = vmatprep.subr.mxu0 0.0
        %554 = vmatpush1.msra.mxu0 0.0
        %555 = vmatprep.subr.mxu0 0.0
        %556 = vmatpush1.msra.mxu0 0.0
        %557 = vmatprep.subr.mxu0 0.0
        %558 = vmatpush1.msra.mxu0 0.0
        %559 = vmatprep.subr.mxu0 0.0
        %560 = vmatpush1.msra.mxu0 0.0
        %561 = vmatprep.subr.mxu0 0.0
        %562 = vmatpush1.msra.mxu0 0.0
        %563 = vmatprep.subr.mxu0 0.0
        %564 = vmatpush1.msra.mxu0 0.0
        %565 = vmatprep.subr.mxu0 %v533
        %566 = vmatpush1.msra.mxu0 %v531
        %567 = vmatprep.subr.mxu0 0.0
        %568 = vmatpush2.msra.mxu0 0.0
        %569 = vmatprep.subr.mxu0 0.0
        %570 = vmatpush2.msra.mxu0 0.0
        %571 = vmatprep.subr.mxu0 0.0
        %572 = vmatpush2.msra.mxu0 0.0
        %573 = vmatprep.subr.mxu0 0.0
        %574 = vmatpush2.msra.mxu0 0.0
        %575 = vmatprep.subr.mxu0 0.0
        %576 = vmatpush2.msra.mxu0 0.0
        %577 = vmatprep.subr.mxu0 0.0
        %578 = vmatpush2.msra.mxu0 0.0
        %579 = vmatprep.subr.mxu0 0.0
        %580 = vmatpush2.msra.mxu0 0.0
        %581 = vmatprep.subr.mxu0 0.0
        %582 = vmatpush2.msra.mxu0 0.0
        %583 = vmatprep.subr.mxu0 0.0
        %584 = vmatpush2.msra.mxu0 0.0
        %585 = vmatprep.subr.mxu0 0.0
        %586 = vmatpush2.msra.mxu0 0.0
        %587 = vmatprep.subr.mxu0 0.0
        %588 = vmatpush2.msra.mxu0 0.0
        %589 = vmatprep.subr.mxu0 0.0
        %590 = vmatpush2.msra.mxu0 0.0
        %591 = vmatprep.subr.mxu0 0.0
        %592 = vmatpush2.msra.mxu0 0.0
        %593 = vmatprep.subr.mxu0 0.0
        %594 = vmatpush2.msra.mxu0 0.0
        %595 = vmatprep.subr.mxu0 0.0
        %596 = vmatpush2.msra.mxu0 0.0
        %597 = vmatprep.subr.mxu0 0.0
        %598 = vmatpush2.msra.mxu0 0.0
        %599 = vmatprep.mubr.f32.mxu0 0.0
        %600 = vmatmul.mubr.f32.gmra.mxu0 %v529
        %v601 = vpop.f32.mrf.mxu0
        %v602 = vadd.f32 0.0, %v601
        %v603 = vpop.f32.mrf.mxu0
        %v604 = vadd.f32 0.0, %v603
        %605 = vdwg.mxu0
        %v606 = vadd.f32 %v487, %v602
        %v607 = vadd.f32 %v489, %v604
        %v608 = vld [vmem:[#allocation2] sm:$0xff]
        %v609 = vld [vmem:[#allocation2 + $0x8] sm:$0xf]
        %610 = vrot.lane.b32.xlu0 %v296, 127
        %v611 = vpop.permute.xlu0 %610
        %v612 = vrot.slane %v611, 4
        %vm613 = vcmask 1039360
        %v614 = vsel %vm613, %v612, %v611
        %v617 = vmul.f32 %v608, %v614
        %v618 = vmul.f32 %v609, %v612
        %s619 = scalar_lea.vmem %s264, 24
        %v620 = vld [vmem:[%s619] sm:$0xff]
        %v623 = vcombine.high %v617, %v617
        %624 = vrot.lane.b32.xlu0 %v617, 1
        %v625 = vpop.permute.xlu0 %624
        %626 = vrot.lane.b32.xlu0 %v623, 1
        %v627 = vpop.permute.xlu0 %626
        %628 = vrot.lane.b32.xlu0 %v618, 1
        %v629 = vpop.permute.xlu0 %628
        %vm630 = vcmask 7168
        %v631 = vsel %vm630, %v625, %v627
        %v632 = vsel %vm630, %v627, %v629
        %v634 = vsel %vm321, %v620, 0
        %v636 = vsel %vm325, %v631, 0
        %v638 = vsel %vm325, %v632, 0
        %640 = vmatprep.subr.mxu0 0.0
        %641 = vmatpush1.msra.mxu0 0.0
        %642 = vmatprep.subr.mxu0 0.0
        %643 = vmatpush1.msra.mxu0 0.0
        %644 = vmatprep.subr.mxu0 0.0
        %645 = vmatpush1.msra.mxu0 0.0
        %646 = vmatprep.subr.mxu0 0.0
        %647 = vmatpush1.msra.mxu0 0.0
        %648 = vmatprep.subr.mxu0 0.0
        %649 = vmatpush1.msra.mxu0 0.0
        %650 = vmatprep.subr.mxu0 0.0
        %651 = vmatpush1.msra.mxu0 0.0
        %652 = vmatprep.subr.mxu0 0.0
        %653 = vmatpush1.msra.mxu0 0.0
        %654 = vmatprep.subr.mxu0 0.0
        %655 = vmatpush1.msra.mxu0 0.0
        %656 = vmatprep.subr.mxu0 0.0
        %657 = vmatpush1.msra.mxu0 0.0
        %658 = vmatprep.subr.mxu0 0.0
        %659 = vmatpush1.msra.mxu0 0.0
        %660 = vmatprep.subr.mxu0 0.0
        %661 = vmatpush1.msra.mxu0 0.0
        %662 = vmatprep.subr.mxu0 0.0
        %663 = vmatpush1.msra.mxu0 0.0
        %664 = vmatprep.subr.mxu0 0.0
        %665 = vmatpush1.msra.mxu0 0.0
        %666 = vmatprep.subr.mxu0 0.0
        %667 = vmatpush1.msra.mxu0 0.0
        %668 = vmatprep.subr.mxu0 0.0
        %669 = vmatpush1.msra.mxu0 0.0
        %670 = vmatprep.subr.mxu0 %v638
        %671 = vmatpush1.msra.mxu0 %v636
        %672 = vmatprep.subr.mxu0 0.0
        %673 = vmatpush2.msra.mxu0 0.0
        %674 = vmatprep.subr.mxu0 0.0
        %675 = vmatpush2.msra.mxu0 0.0
        %676 = vmatprep.subr.mxu0 0.0
        %677 = vmatpush2.msra.mxu0 0.0
        %678 = vmatprep.subr.mxu0 0.0
        %679 = vmatpush2.msra.mxu0 0.0
        %680 = vmatprep.subr.mxu0 0.0
        %681 = vmatpush2.msra.mxu0 0.0
        %682 = vmatprep.subr.mxu0 0.0
        %683 = vmatpush2.msra.mxu0 0.0
        %684 = vmatprep.subr.mxu0 0.0
        %685 = vmatpush2.msra.mxu0 0.0
        %686 = vmatprep.subr.mxu0 0.0
        %687 = vmatpush2.msra.mxu0 0.0
        %688 = vmatprep.subr.mxu0 0.0
        %689 = vmatpush2.msra.mxu0 0.0
        %690 = vmatprep.subr.mxu0 0.0
        %691 = vmatpush2.msra.mxu0 0.0
        %692 = vmatprep.subr.mxu0 0.0
        %693 = vmatpush2.msra.mxu0 0.0
        %694 = vmatprep.subr.mxu0 0.0
        %695 = vmatpush2.msra.mxu0 0.0
        %696 = vmatprep.subr.mxu0 0.0
        %697 = vmatpush2.msra.mxu0 0.0
        %698 = vmatprep.subr.mxu0 0.0
        %699 = vmatpush2.msra.mxu0 0.0
        %700 = vmatprep.subr.mxu0 0.0
        %701 = vmatpush2.msra.mxu0 0.0
        %702 = vmatprep.subr.mxu0 0.0
        %703 = vmatpush2.msra.mxu0 0.0
        %704 = vmatprep.mubr.f32.mxu0 0.0
        %705 = vmatmul.mubr.f32.gmra.mxu0 %v634
        %v706 = vpop.f32.mrf.mxu0
        %v707 = vadd.f32 0.0, %v706
        %v708 = vpop.f32.mrf.mxu0
        %v709 = vadd.f32 0.0, %v708
        %710 = vdwg.mxu0
        %v711 = vadd.f32 %v606, %v707
        %v712 = vadd.f32 %v607, %v709
        %v713 = vld [vmem:[#allocation2 + $0x4] sm:$0xff]
        %s714 = scalar_lea.vmem %s264, 32
        %v715 = vld [vmem:[%s714] sm:$0xff]
        %v717 = vcombine.high %v713, %v713
        %v719 = vsel %vm321, %v715, 0
        %v721 = vsel %vm325, %v713, 0
        %v723 = vsel %vm325, %v717, 0
        %725 = vmatprep.subr.mxu0 0.0
        %726 = vmatpush1.msra.mxu0 0.0
        %727 = vmatprep.subr.mxu0 0.0
        %728 = vmatpush1.msra.mxu0 0.0
        %729 = vmatprep.subr.mxu0 0.0
        %730 = vmatpush1.msra.mxu0 0.0
        %731 = vmatprep.subr.mxu0 0.0
        %732 = vmatpush1.msra.mxu0 0.0
        %733 = vmatprep.subr.mxu0 0.0
        %734 = vmatpush1.msra.mxu0 0.0
        %735 = vmatprep.subr.mxu0 0.0
        %736 = vmatpush1.msra.mxu0 0.0
        %737 = vmatprep.subr.mxu0 0.0
        %738 = vmatpush1.msra.mxu0 0.0
        %739 = vmatprep.subr.mxu0 0.0
        %740 = vmatpush1.msra.mxu0 0.0
        %741 = vmatprep.subr.mxu0 0.0
        %742 = vmatpush1.msra.mxu0 0.0
        %743 = vmatprep.subr.mxu0 0.0
        %744 = vmatpush1.msra.mxu0 0.0
        %745 = vmatprep.subr.mxu0 0.0
        %746 = vmatpush1.msra.mxu0 0.0
        %747 = vmatprep.subr.mxu0 0.0
        %748 = vmatpush1.msra.mxu0 0.0
        %749 = vmatprep.subr.mxu0 0.0
        %750 = vmatpush1.msra.mxu0 0.0
        %751 = vmatprep.subr.mxu0 0.0
        %752 = vmatpush1.msra.mxu0 0.0
        %753 = vmatprep.subr.mxu0 0.0
        %754 = vmatpush1.msra.mxu0 0.0
        %755 = vmatprep.subr.mxu0 %v723
        %756 = vmatpush1.msra.mxu0 %v721
        %757 = vmatprep.subr.mxu0 0.0
        %758 = vmatpush2.msra.mxu0 0.0
        %759 = vmatprep.subr.mxu0 0.0
        %760 = vmatpush2.msra.mxu0 0.0
        %761 = vmatprep.subr.mxu0 0.0
        %762 = vmatpush2.msra.mxu0 0.0
        %763 = vmatprep.subr.mxu0 0.0
        %764 = vmatpush2.msra.mxu0 0.0
        %765 = vmatprep.subr.mxu0 0.0
        %766 = vmatpush2.msra.mxu0 0.0
        %767 = vmatprep.subr.mxu0 0.0
        %768 = vmatpush2.msra.mxu0 0.0
        %769 = vmatprep.subr.mxu0 0.0
        %770 = vmatpush2.msra.mxu0 0.0
        %771 = vmatprep.subr.mxu0 0.0
        %772 = vmatpush2.msra.mxu0 0.0
        %773 = vmatprep.subr.mxu0 0.0
        %774 = vmatpush2.msra.mxu0 0.0
        %775 = vmatprep.subr.mxu0 0.0
        %776 = vmatpush2.msra.mxu0 0.0
        %777 = vmatprep.subr.mxu0 0.0
        %778 = vmatpush2.msra.mxu0 0.0
        %779 = vmatprep.subr.mxu0 0.0
        %780 = vmatpush2.msra.mxu0 0.0
        %781 = vmatprep.subr.mxu0 0.0
        %782 = vmatpush2.msra.mxu0 0.0
        %783 = vmatprep.subr.mxu0 0.0
        %784 = vmatpush2.msra.mxu0 0.0
        %785 = vmatprep.subr.mxu0 0.0
        %786 = vmatpush2.msra.mxu0 0.0
        %787 = vmatprep.subr.mxu0 0.0
        %788 = vmatpush2.msra.mxu0 0.0
        %789 = vmatprep.mubr.f32.mxu0 0.0
        %790 = vmatmul.mubr.f32.gmra.mxu0 %v719
        %v791 = vpop.f32.mrf.mxu0
        %v792 = vadd.f32 0.0, %v791
        %v793 = vpop.f32.mrf.mxu0
        %v794 = vadd.f32 0.0, %v793
        %795 = vdwg.mxu0
        %v796 = vadd.f32 %v711, %v792
        %v797 = vadd.f32 %v712, %v794
        %v798 = vld [vmem:[#allocation2 + $0x4] sm:$0xff]
        %v799 = vld [vmem:[#allocation2 + $0xc] sm:$0xf]
        %800 = vrot.lane.b32.xlu0 %v504, 1
        %v801 = vpop.permute.xlu0 %800
        %v802 = vrot.slane %v801, 4
        %v803 = vsel %vm630, %v802, %v801
        %v806 = vmul.f32 %v798, %v803
        %v807 = vmul.f32 %v799, %v802
        %s808 = scalar_lea.vmem %s264, 40
        %v809 = vld [vmem:[%s808] sm:$0xff]
        %v812 = vcombine.high %v806, %v806
        %813 = vrot.lane.b32.xlu0 %v806, 127
        %v814 = vpop.permute.xlu0 %813
        %815 = vrot.lane.b32.xlu0 %v812, 127
        %v816 = vpop.permute.xlu0 %815
        %817 = vrot.lane.b32.xlu0 %v807, 127
        %v818 = vpop.permute.xlu0 %817
        %v819 = vsel %vm613, %v814, %v816
        %v820 = vsel %vm613, %v816, %v818
        %v822 = vsel %vm321, %v809, 0
        %v824 = vsel %vm325, %v819, 0
        %v826 = vsel %vm325, %v820, 0
        %828 = vmatprep.subr.mxu0 0.0
        %829 = vmatpush1.msra.mxu0 0.0
        %830 = vmatprep.subr.mxu0 0.0
        %831 = vmatpush1.msra.mxu0 0.0
        %832 = vmatprep.subr.mxu0 0.0
        %833 = vmatpush1.msra.mxu0 0.0
        %834 = vmatprep.subr.mxu0 0.0
        %835 = vmatpush1.msra.mxu0 0.0
        %836 = vmatprep.subr.mxu0 0.0
        %837 = vmatpush1.msra.mxu0 0.0
        %838 = vmatprep.subr.mxu0 0.0
        %839 = vmatpush1.msra.mxu0 0.0
        %840 = vmatprep.subr.mxu0 0.0
        %841 = vmatpush1.msra.mxu0 0.0
        %842 = vmatprep.subr.mxu0 0.0
        %843 = vmatpush1.msra.mxu0 0.0
        %844 = vmatprep.subr.mxu0 0.0
        %845 = vmatpush1.msra.mxu0 0.0
        %846 = vmatprep.subr.mxu0 0.0
        %847 = vmatpush1.msra.mxu0 0.0
        %848 = vmatprep.subr.mxu0 0.0
        %849 = vmatpush1.msra.mxu0 0.0
        %850 = vmatprep.subr.mxu0 0.0
        %851 = vmatpush1.msra.mxu0 0.0
        %852 = vmatprep.subr.mxu0 0.0
        %853 = vmatpush1.msra.mxu0 0.0
        %854 = vmatprep.subr.mxu0 0.0
        %855 = vmatpush1.msra.mxu0 0.0
        %856 = vmatprep.subr.mxu0 0.0
        %857 = vmatpush1.msra.mxu0 0.0
        %858 = vmatprep.subr.mxu0 %v826
        %859 = vmatpush1.msra.mxu0 %v824
        %860 = vmatprep.subr.mxu0 0.0
        %861 = vmatpush2.msra.mxu0 0.0
        %862 = vmatprep.subr.mxu0 0.0
        %863 = vmatpush2.msra.mxu0 0.0
        %864 = vmatprep.subr.mxu0 0.0
        %865 = vmatpush2.msra.mxu0 0.0
        %866 = vmatprep.subr.mxu0 0.0
        %867 = vmatpush2.msra.mxu0 0.0
        %868 = vmatprep.subr.mxu0 0.0
        %869 = vmatpush2.msra.mxu0 0.0
        %870 = vmatprep.subr.mxu0 0.0
        %871 = vmatpush2.msra.mxu0 0.0
        %872 = vmatprep.subr.mxu0 0.0
        %873 = vmatpush2.msra.mxu0 0.0
        %874 = vmatprep.subr.mxu0 0.0
        %875 = vmatpush2.msra.mxu0 0.0
        %876 = vmatprep.subr.mxu0 0.0
        %877 = vmatpush2.msra.mxu0 0.0
        %878 = vmatprep.subr.mxu0 0.0
        %879 = vmatpush2.msra.mxu0 0.0
        %880 = vmatprep.subr.mxu0 0.0
        %881 = vmatpush2.msra.mxu0 0.0
        %882 = vmatprep.subr.mxu0 0.0
        %883 = vmatpush2.msra.mxu0 0.0
        %884 = vmatprep.subr.mxu0 0.0
        %885 = vmatpush2.msra.mxu0 0.0
        %886 = vmatprep.subr.mxu0 0.0
        %887 = vmatpush2.msra.mxu0 0.0
        %888 = vmatprep.subr.mxu0 0.0
        %889 = vmatpush2.msra.mxu0 0.0
        %890 = vmatprep.subr.mxu0 0.0
        %891 = vmatpush2.msra.mxu0 0.0
        %892 = vmatprep.mubr.f32.mxu0 0.0
        %893 = vmatmul.mubr.f32.gmra.mxu0 %v822
        %v894 = vpop.f32.mrf.mxu0
        %v895 = vadd.f32 0.0, %v894
        %v896 = vpop.f32.mrf.mxu0
        %v897 = vadd.f32 0.0, %v896
        %898 = vdwg.mxu0
        %v899 = vadd.f32 %v796, %v895
        %v900 = vadd.f32 %v797, %v897
        %v901 = vld [vmem:[#allocation2 + $0x4] sm:$0xff]
        %v902 = vld [vmem:[#allocation2 + $0xc] sm:$0xf]
        %903 = vrot.lane.b32.xlu0 %v296, 15
        %v904 = vpop.permute.xlu0 %903
        %v905 = vrot.slane %v904, 4
        %v906 = vsel %vm525, %v905, %v904
        %v909 = vmul.f32 %v901, %v906
        %v910 = vmul.f32 %v902, %v905
        %s911 = scalar_lea.vmem %s264, 48
        %v912 = vld [vmem:[%s911] sm:$0xff]
        %v915 = vcombine.high %v909, %v909
        %916 = vrot.lane.b32.xlu0 %v909, 113
        %v917 = vpop.permute.xlu0 %916
        %918 = vrot.lane.b32.xlu0 %v915, 113
        %v919 = vpop.permute.xlu0 %918
        %920 = vrot.lane.b32.xlu0 %v910, 113
        %v921 = vpop.permute.xlu0 %920
        %v922 = vsel %vm508, %v917, %v919
        %v923 = vsel %vm508, %v919, %v921
        %v925 = vsel %vm321, %v912, 0
        %v927 = vsel %vm325, %v922, 0
        %v929 = vsel %vm325, %v923, 0
        %931 = vmatprep.subr.mxu0 0.0
        %932 = vmatpush1.msra.mxu0 0.0
        %933 = vmatprep.subr.mxu0 0.0
        %934 = vmatpush1.msra.mxu0 0.0
        %935 = vmatprep.subr.mxu0 0.0
        %936 = vmatpush1.msra.mxu0 0.0
        %937 = vmatprep.subr.mxu0 0.0
        %938 = vmatpush1.msra.mxu0 0.0
        %939 = vmatprep.subr.mxu0 0.0
        %940 = vmatpush1.msra.mxu0 0.0
        %941 = vmatprep.subr.mxu0 0.0
        %942 = vmatpush1.msra.mxu0 0.0
        %943 = vmatprep.subr.mxu0 0.0
        %944 = vmatpush1.msra.mxu0 0.0
        %945 = vmatprep.subr.mxu0 0.0
        %946 = vmatpush1.msra.mxu0 0.0
        %947 = vmatprep.subr.mxu0 0.0
        %948 = vmatpush1.msra.mxu0 0.0
        %949 = vmatprep.subr.mxu0 0.0
        %950 = vmatpush1.msra.mxu0 0.0
        %951 = vmatprep.subr.mxu0 0.0
        %952 = vmatpush1.msra.mxu0 0.0
        %953 = vmatprep.subr.mxu0 0.0
        %954 = vmatpush1.msra.mxu0 0.0
        %955 = vmatprep.subr.mxu0 0.0
        %956 = vmatpush1.msra.mxu0 0.0
        %957 = vmatprep.subr.mxu0 0.0
        %958 = vmatpush1.msra.mxu0 0.0
        %959 = vmatprep.subr.mxu0 0.0
        %960 = vmatpush1.msra.mxu0 0.0
        %961 = vmatprep.subr.mxu0 %v929
        %962 = vmatpush1.msra.mxu0 %v927
        %963 = vmatprep.subr.mxu0 0.0
        %964 = vmatpush2.msra.mxu0 0.0
        %965 = vmatprep.subr.mxu0 0.0
        %966 = vmatpush2.msra.mxu0 0.0
        %967 = vmatprep.subr.mxu0 0.0
        %968 = vmatpush2.msra.mxu0 0.0
        %969 = vmatprep.subr.mxu0 0.0
        %970 = vmatpush2.msra.mxu0 0.0
        %971 = vmatprep.subr.mxu0 0.0
        %972 = vmatpush2.msra.mxu0 0.0
        %973 = vmatprep.subr.mxu0 0.0
        %974 = vmatpush2.msra.mxu0 0.0
        %975 = vmatprep.subr.mxu0 0.0
        %976 = vmatpush2.msra.mxu0 0.0
        %977 = vmatprep.subr.mxu0 0.0
        %978 = vmatpush2.msra.mxu0 0.0
        %979 = vmatprep.subr.mxu0 0.0
        %980 = vmatpush2.msra.mxu0 0.0
        %981 = vmatprep.subr.mxu0 0.0
        %982 = vmatpush2.msra.mxu0 0.0
        %983 = vmatprep.subr.mxu0 0.0
        %984 = vmatpush2.msra.mxu0 0.0
        %985 = vmatprep.subr.mxu0 0.0
        %986 = vmatpush2.msra.mxu0 0.0
        %987 = vmatprep.subr.mxu0 0.0
        %988 = vmatpush2.msra.mxu0 0.0
        %989 = vmatprep.subr.mxu0 0.0
        %990 = vmatpush2.msra.mxu0 0.0
        %991 = vmatprep.subr.mxu0 0.0
        %992 = vmatpush2.msra.mxu0 0.0
        %993 = vmatprep.subr.mxu0 0.0
        %994 = vmatpush2.msra.mxu0 0.0
        %995 = vmatprep.mubr.f32.mxu0 0.0
        %996 = vmatmul.mubr.f32.gmra.mxu0 %v925
        %v997 = vpop.f32.mrf.mxu0
        %v998 = vadd.f32 0.0, %v997
        %v999 = vpop.f32.mrf.mxu0
        %v1000 = vadd.f32 0.0, %v999
        %1001 = vdwg.mxu0
        %v1002 = vadd.f32 %v899, %v998
        %v1003 = vadd.f32 %v900, %v1000
        %v1004 = vld [vmem:[#allocation2 + $0x4] sm:$0xff]
        %v1005 = vld [vmem:[#allocation2 + $0xc] sm:$0xf]
        %s1006 = scalar_lea.vmem %s264, 56
        %v1007 = vld [vmem:[%s1006] sm:$0xff]
        %v1010 = vcombine.high %v1004, %v1004
        %1011 = vrot.lane.b32.xlu0 %v1004, 112
        %v1012 = vpop.permute.xlu0 %1011
        %1013 = vrot.lane.b32.xlu0 %v1010, 112
        %v1014 = vpop.permute.xlu0 %1013
        %1015 = vrot.lane.b32.xlu0 %v1005, 112
        %v1016 = vpop.permute.xlu0 %1015
        %vm1017 = vcmask 916480
        %v1018 = vsel %vm1017, %v1012, %v1014
        %v1019 = vsel %vm1017, %v1014, %v1016
        %v1021 = vsel %vm321, %v1007, 0
        %v1023 = vsel %vm325, %v1018, 0
        %v1025 = vsel %vm325, %v1019, 0
        %1027 = vmatprep.subr.mxu0 0.0
        %1028 = vmatpush1.msra.mxu0 0.0
        %1029 = vmatprep.subr.mxu0 0.0
        %1030 = vmatpush1.msra.mxu0 0.0
        %1031 = vmatprep.subr.mxu0 0.0
        %1032 = vmatpush1.msra.mxu0 0.0
        %1033 = vmatprep.subr.mxu0 0.0
        %1034 = vmatpush1.msra.mxu0 0.0
        %1035 = vmatprep.subr.mxu0 0.0
        %1036 = vmatpush1.msra.mxu0 0.0
        %1037 = vmatprep.subr.mxu0 0.0
        %1038 = vmatpush1.msra.mxu0 0.0
        %1039 = vmatprep.subr.mxu0 0.0
        %1040 = vmatpush1.msra.mxu0 0.0
        %1041 = vmatprep.subr.mxu0 0.0
        %1042 = vmatpush1.msra.mxu0 0.0
        %1043 = vmatprep.subr.mxu0 0.0
        %1044 = vmatpush1.msra.mxu0 0.0
        %1045 = vmatprep.subr.mxu0 0.0
        %1046 = vmatpush1.msra.mxu0 0.0
        %1047 = vmatprep.subr.mxu0 0.0
        %1048 = vmatpush1.msra.mxu0 0.0
        %1049 = vmatprep.subr.mxu0 0.0
        %1050 = vmatpush1.msra.mxu0 0.0
        %1051 = vmatprep.subr.mxu0 0.0
        %1052 = vmatpush1.msra.mxu0 0.0
        %1053 = vmatprep.subr.mxu0 0.0
        %1054 = vmatpush1.msra.mxu0 0.0
        %1055 = vmatprep.subr.mxu0 0.0
        %1056 = vmatpush1.msra.mxu0 0.0
        %1057 = vmatprep.subr.mxu0 %v1025
        %1058 = vmatpush1.msra.mxu0 %v1023
        %1059 = vmatprep.subr.mxu0 0.0
        %1060 = vmatpush2.msra.mxu0 0.0
        %1061 = vmatprep.subr.mxu0 0.0
        %1062 = vmatpush2.msra.mxu0 0.0
        %1063 = vmatprep.subr.mxu0 0.0
        %1064 = vmatpush2.msra.mxu0 0.0
        %1065 = vmatprep.subr.mxu0 0.0
        %1066 = vmatpush2.msra.mxu0 0.0
        %1067 = vmatprep.subr.mxu0 0.0
        %1068 = vmatpush2.msra.mxu0 0.0
        %1069 = vmatprep.subr.mxu0 0.0
        %1070 = vmatpush2.msra.mxu0 0.0
        %1071 = vmatprep.subr.mxu0 0.0
        %1072 = vmatpush2.msra.mxu0 0.0
        %1073 = vmatprep.subr.mxu0 0.0
        %1074 = vmatpush2.msra.mxu0 0.0
        %1075 = vmatprep.subr.mxu0 0.0
        %1076 = vmatpush2.msra.mxu0 0.0
        %1077 = vmatprep.subr.mxu0 0.0
        %1078 = vmatpush2.msra.mxu0 0.0
        %1079 = vmatprep.subr.mxu0 0.0
        %1080 = vmatpush2.msra.mxu0 0.0
        %1081 = vmatprep.subr.mxu0 0.0
        %1082 = vmatpush2.msra.mxu0 0.0
        %1083 = vmatprep.subr.mxu0 0.0
        %1084 = vmatpush2.msra.mxu0 0.0
        %1085 = vmatprep.subr.mxu0 0.0
        %1086 = vmatpush2.msra.mxu0 0.0
        %1087 = vmatprep.subr.mxu0 0.0
        %1088 = vmatpush2.msra.mxu0 0.0
        %1089 = vmatprep.subr.mxu0 0.0
        %1090 = vmatpush2.msra.mxu0 0.0
        %1091 = vmatprep.mubr.f32.mxu0 0.0
        %1092 = vmatmul.mubr.f32.gmra.mxu0 %v1021
        %v1093 = vpop.f32.mrf.mxu0
        %v1094 = vadd.f32 0.0, %v1093
        %v1095 = vpop.f32.mrf.mxu0
        %v1096 = vadd.f32 0.0, %v1095
        %1097 = vdwg.mxu0
        %v1098 = vadd.f32 %v1002, %v1094
        %v1099 = vadd.f32 %v1003, %v1096
        %v1100 = vld [vmem:[#allocation2 + $0x4] sm:$0xff]
        %v1101 = vld [vmem:[#allocation2 + $0xc] sm:$0xf]
        %1102 = vrot.lane.b32.xlu0 %v504, 17
        %v1103 = vpop.permute.xlu0 %1102
        %v1104 = vrot.slane %v1103, 4
        %v1105 = vsel %vm410, %v1104, %v1103
        %v1108 = vmul.f32 %v1100, %v1105
        %v1109 = vmul.f32 %v1101, %v1104
        %s1110 = scalar_lea.vmem %s264, 64
        %v1111 = vld [vmem:[%s1110] sm:$0xff]
        %v1114 = vcombine.high %v1108, %v1108
        %1115 = vrot.lane.b32.xlu0 %v1108, 111
        %v1116 = vpop.permute.xlu0 %1115
        %1117 = vrot.lane.b32.xlu0 %v1114, 111
        %v1118 = vpop.permute.xlu0 %1117
        %1119 = vrot.lane.b32.xlu0 %v1109, 111
        %v1120 = vpop.permute.xlu0 %1119
        %v1121 = vsel %vm300, %v1116, %v1118
        %v1122 = vsel %vm300, %v1118, %v1120
        %v1124 = vsel %vm321, %v1111, 0
        %v1126 = vsel %vm325, %v1121, 0
        %v1128 = vsel %vm325, %v1122, 0
        %1130 = vmatprep.subr.mxu0 0.0
        %1131 = vmatpush1.msra.mxu0 0.0
        %1132 = vmatprep.subr.mxu0 0.0
        %1133 = vmatpush1.msra.mxu0 0.0
        %1134 = vmatprep.subr.mxu0 0.0
        %1135 = vmatpush1.msra.mxu0 0.0
        %1136 = vmatprep.subr.mxu0 0.0
        %1137 = vmatpush1.msra.mxu0 0.0
        %1138 = vmatprep.subr.mxu0 0.0
        %1139 = vmatpush1.msra.mxu0 0.0
        %1140 = vmatprep.subr.mxu0 0.0
        %1141 = vmatpush1.msra.mxu0 0.0
        %1142 = vmatprep.subr.mxu0 0.0
        %1143 = vmatpush1.msra.mxu0 0.0
        %1144 = vmatprep.subr.mxu0 0.0
        %1145 = vmatpush1.msra.mxu0 0.0
        %1146 = vmatprep.subr.mxu0 0.0
        %1147 = vmatpush1.msra.mxu0 0.0
        %1148 = vmatprep.subr.mxu0 0.0
        %1149 = vmatpush1.msra.mxu0 0.0
        %1150 = vmatprep.subr.mxu0 0.0
        %1151 = vmatpush1.msra.mxu0 0.0
        %1152 = vmatprep.subr.mxu0 0.0
        %1153 = vmatpush1.msra.mxu0 0.0
        %1154 = vmatprep.subr.mxu0 0.0
        %1155 = vmatpush1.msra.mxu0 0.0
        %1156 = vmatprep.subr.mxu0 0.0
        %1157 = vmatpush1.msra.mxu0 0.0
        %1158 = vmatprep.subr.mxu0 0.0
        %1159 = vmatpush1.msra.mxu0 0.0
        %1160 = vmatprep.subr.mxu0 %v1128
        %1161 = vmatpush1.msra.mxu0 %v1126
        %1162 = vmatprep.subr.mxu0 0.0
        %1163 = vmatpush2.msra.mxu0 0.0
        %1164 = vmatprep.subr.mxu0 0.0
        %1165 = vmatpush2.msra.mxu0 0.0
        %1166 = vmatprep.subr.mxu0 0.0
        %1167 = vmatpush2.msra.mxu0 0.0
        %1168 = vmatprep.subr.mxu0 0.0
        %1169 = vmatpush2.msra.mxu0 0.0
        %1170 = vmatprep.subr.mxu0 0.0
        %1171 = vmatpush2.msra.mxu0 0.0
        %1172 = vmatprep.subr.mxu0 0.0
        %1173 = vmatpush2.msra.mxu0 0.0
        %1174 = vmatprep.subr.mxu0 0.0
        %1175 = vmatpush2.msra.mxu0 0.0
        %1176 = vmatprep.subr.mxu0 0.0
        %1177 = vmatpush2.msra.mxu0 0.0
        %1178 = vmatprep.subr.mxu0 0.0
        %1179 = vmatpush2.msra.mxu0 0.0
        %1180 = vmatprep.subr.mxu0 0.0
        %1181 = vmatpush2.msra.mxu0 0.0
        %1182 = vmatprep.subr.mxu0 0.0
        %1183 = vmatpush2.msra.mxu0 0.0
        %1184 = vmatprep.subr.mxu0 0.0
        %1185 = vmatpush2.msra.mxu0 0.0
        %1186 = vmatprep.subr.mxu0 0.0
        %1187 = vmatpush2.msra.mxu0 0.0
        %1188 = vmatprep.subr.mxu0 0.0
        %1189 = vmatpush2.msra.mxu0 0.0
        %1190 = vmatprep.subr.mxu0 0.0
        %1191 = vmatpush2.msra.mxu0 0.0
        %1192 = vmatprep.subr.mxu0 0.0
        %1193 = vmatpush2.msra.mxu0 0.0
        %1194 = vmatprep.mubr.f32.mxu0 0.0
        %1195 = vmatmul.mubr.f32.gmra.mxu0 %v1124
        %v1196 = vpop.f32.mrf.mxu0
        %v1197 = vadd.f32 0.0, %v1196
        %v1198 = vpop.f32.mrf.mxu0
        %v1199 = vadd.f32 0.0, %v1198
        %1200 = vdwg.mxu0
        %v1201 = vadd.f32 %v1098, %v1197
        %v1202 = vadd.f32 %v1099, %v1199
        %v1203 = vld [vmem:[%s268] sm:$0xff]
        %1205 = vset.pattern.permute.xlu0 0
        %1206 = vperm.xlu0 %1205, %v1203
        %v1207 = vpop.permute.xlu0 %1206
        %v1209 = vadd.f32 %v1201, %v1207
        %v1210 = vadd.f32 %v1202, %v1207
        %vm1211 = vcmp.gt.f32.partialorder %v1209, 0.0
        %vm1212 = vcmp.gt.f32.partialorder %v1210, 0.0
        %v1213 = vmul.f32 %v1209, 0.01
        %v1214 = vmul.f32 %v1210, 0.01
        %v1215 = vsel %vm1211, %v1209, %v1213
        %v1216 = vsel %vm1212, %v1210, %v1214
        %1217 = vst [vmem:[%s255] sm:$0xff] %v1215
        %1218 = vst [vmem:[%s255 + $0x8] sm:$0xff] %v1216
        %s1219 = sand.u32 %s153, 1
        %s1220 = scalar_lea.sflag [#allocation4], %s1219
        %s1221 = sand.u32 %s153, 1
        %s1222 = smul.addr %s1221, 16
        %s1223 = scalar_lea.vmem [#allocation3], %s1222
        // Predicated region
        $region41: #{tpu_custom_call.1} parent=35 // pred_check
          %p1224 = pneg %p163
        $region42: #{tpu_custom_call.1} parent=35 // pred_check_branch
          %1226 = sbr.rel (%p1224) target = $region44
        $region43: #{tpu_custom_call.1} parent=35 // pred_region
          %s1227 = smul.u32 2, %s25
          %s1229 = ssub.s32 256, 256
          %1230 = vsyncadd %s1220, %s1229
          %s1231 = smul.addr %s23, 2
          %s1232 = sadd.s32 %s1227, %s1231
          %s1233 = smul.addr %s24, 2
          %s1234 = sadd.s32 %s1232, %s1233
          %s1235 = smul.addr %s1234, 128
          %s1236 = scalar_lea.hbm %s4, %s1235
          %s1238 = sshll.u32 %s1223, 4
          %s1239 = int_to_ptr.vmem [resolvable:$true] %s1238
          %1241 = dma.vmem_to_hbm [thread:$0]  %s1239, 256, %s1236, %s1220
        $region44: #{tpu_custom_call.1} parent=35 // pred_fallthru
          _
      $region36: #{tpu_custom_call.1} parent=5 // pred_fallthru
        _
      %p1242 = scmp.le.s32.totalorder 2, %s13
      // Predicated region
      $region45: #{tpu_custom_call.1} parent=5 // pred_check
        %p1243 = pneg %p1242
      $region46: #{tpu_custom_call.1} parent=5 // pred_check_branch
        %1245 = sbr.rel (%p1243) target = $region48
      $region47: #{tpu_custom_call.1} parent=5 // pred_region
        %s1246 = ssub.s32 %s13, 2
        // Predicated region
        $region49: #{tpu_custom_call.1} parent=47 // pred_check
          %p1247 = pneg %p169
        $region50: #{tpu_custom_call.1} parent=47 // pred_check_branch
          %1249 = sbr.rel (%p1247) target = $region52
        $region51: #{tpu_custom_call.1} parent=47 // pred_region
          %s1250 = sand.u32 %s154, 1
          %s1251 = scalar_lea.sflag [#allocation4], %s1250
          %s1252 = sand.u32 %s154, 1
          %s1253 = smul.addr %s1252, 16
          %s1254 = scalar_lea.vmem [#allocation3], %s1253
          %1255 = dma.done %s1251, 256
        $region52: #{tpu_custom_call.1} parent=47 // pred_fallthru
          _
      $region48: #{tpu_custom_call.1} parent=5 // pred_fallthru
        _
    $region6: #{tpu_custom_call.1} parent=1 // loop_footer
      %s17 = sadd.s32 1, %s13
    $region7: #{tpu_custom_call.1} parent=1 // loop_footer_branch
      %12 = sbr.rel target = $region3
    $region8: #{tpu_custom_call.1} parent=1 // loop_exit
      _
    %1256 = vsyncpa [#allocation4], 1
    %s1257 = scalar_lea.sflag [#allocation4], 1
    %1258 = vsyncpa %s1257, 1

</llo_original>
